<compile_context>
chip_gen: v7x
topology: tpu7x:2x2x1
jax: 0.10.0
libtpu: 0.0.40
codegen_flags: <defaults>
</compile_context>

<pallas_src>
import numpy as np
import jax
import jax.numpy as jnp
from jax.experimental import pallas as pl
from jax.experimental.pallas import tpu as pltpu


# ----------------------------------------------------------------------------
# host-side, one-time constant helpers
# ----------------------------------------------------------------------------

def make_shift_masks(H, W):
    """(9, 1, H*W) masks: mask[t, 0, h*W+w] = 1 iff tap t reads a valid pixel."""
    hw = H * W
    m = np.zeros((9, 1, hw), dtype=np.float32)
    for t in range(9):
        dy, dx = t // 3, t % 3
        for h in range(H):
            for w in range(W):
                hh, ww = h + dy - 1, w + dx - 1
                if 0 <= hh < H and 0 <= ww < W:
                    m[t, 0, h * W + w] = 1.0
    return m


def make_pool_matrix(H, W):
    """(H*W, (H//2)*(W//2)) matrix implementing 2x2 average pooling as a matmul."""
    H2, W2 = H // 2, W // 2
    p = np.zeros((H * W, H2 * W2), dtype=np.float32)
    for h2 in range(H2):
        for w2 in range(W2):
            col = h2 * W2 + w2
            for dh in range(2):
                for dw in range(2):
                    p[(2 * h2 + dh) * W + (2 * w2 + dw), col] = 0.25
    return p


def _lrelu(x):
    return jnp.where(x >= 0.0, x, 0.2 * x)


# ----------------------------------------------------------------------------
# Pallas kernels
# ----------------------------------------------------------------------------

def _conv1x1_lrelu_kernel(w_ref, b_ref, x_ref, o_ref):
    # fromrgb: (Co, Ci) @ (Ci, HW) + b, then leaky_relu(0.2).  HW is on the lane axis.
    y = jnp.dot(w_ref[...], x_ref[0], preferred_element_type=jnp.float32)
    y = y + b_ref[...]
    o_ref[0] = _lrelu(y).astype(o_ref.dtype)


def conv1x1_lrelu(x, w, b):
    """x: (N, Ci, HW), w: (Co, Ci), b: (Co, 1) -> (N, Co, HW)."""
    N, Ci, HW = x.shape
    Co = w.shape[0]
    return pl.pallas_call(
        _conv1x1_lrelu_kernel,
        out_shape=jax.ShapeDtypeStruct((N, Co, HW), x.dtype),
        grid=(N,),
        in_specs=[
            pl.BlockSpec((Co, Ci), lambda n: (0, 0)),
            pl.BlockSpec((Co, 1), lambda n: (0, 0)),
            pl.BlockSpec((1, Ci, HW), lambda n: (n, 0, 0)),
        ],
        out_specs=pl.BlockSpec((1, Co, HW), lambda n: (n, 0, 0)),
        compiler_params=pltpu.CompilerParams(dimension_semantics=("parallel",)),
    )(w, b, x)


def _make_conv3x3_kernel(H, W, Co, with_pool, pad):
    """3x3 conv (padding=1) + bias + lrelu, optionally fused 2x2 avg-pool + lrelu.

    Activations are (C, H*W) with H*W on the lane axis.  The conv is 9 MXU matmuls
    against shifted views of a zero-padded flat copy of the input in VMEM scratch;
    row-wrap contributions are zeroed with precomputed masks.
    """
    HW = H * W

    def conv_part(w_ref, b_ref, m_ref, x_ref, xp_ref):
        xp_ref[...] = jnp.zeros_like(xp_ref)            # (Ci, HW + 2*pad)
        xp_ref[:, pad:pad + HW] = x_ref[0]
        acc = jnp.zeros((Co, HW), jnp.float32)
        for t in range(9):
            dy, dx = t // 3, t % 3
            delta = (dy - 1) * W + (dx - 1)
            xs = xp_ref[:, pad + delta:pad + delta + HW]   # shifted (Ci, HW) view
            acc = acc + jnp.dot(w_ref[t], xs * m_ref[t],
                                preferred_element_type=jnp.float32)
        return _lrelu(acc + b_ref[...])

    if with_pool:
        def kernel(w_ref, b_ref, m_ref, p_ref, x_ref, o_ref, xp_ref):
            y = conv_part(w_ref, b_ref, m_ref, x_ref, xp_ref)
            z = jnp.dot(y, p_ref[...], preferred_element_type=jnp.float32)  # avg-pool
            o_ref[0] = _lrelu(z).astype(o_ref.dtype)
    else:
        def kernel(w_ref, b_ref, m_ref, x_ref, o_ref, xp_ref):
            y = conv_part(w_ref, b_ref, m_ref, x_ref, xp_ref)
            o_ref[0] = y.astype(o_ref.dtype)
    return kernel


def conv3x3_block(x, w9, b, masks, H, W, pool_mat=None):
    """x: (N, Ci, H*W); w9: (9, Co, Ci); b: (Co, 1); masks: (9, 1, H*W);
    pool_mat: optional (H*W, H*W//4).  Returns (N, Co, H*W[/4])."""
    N, Ci, HW = x.shape
    assert HW == H * W
    Co = w9.shape[1]
    with_pool = pool_mat is not None
    out_hw = pool_mat.shape[1] if with_pool else HW
    pad = W + 1                                   # enough zeros for all 9 tap shifts

    kernel = _make_conv3x3_kernel(H, W, Co, with_pool, pad)

    in_specs = [
        pl.BlockSpec((9, Co, Ci), lambda n: (0, 0, 0)),
        pl.BlockSpec((Co, 1), lambda n: (0, 0)),
        pl.BlockSpec((9, 1, HW), lambda n: (0, 0, 0)),
    ]
    args = [w9, b, masks]
    if with_pool:
        in_specs.append(pl.BlockSpec((HW, out_hw), lambda n: (0, 0)))
        args.append(pool_mat)
    in_specs.append(pl.BlockSpec((1, Ci, HW), lambda n: (n, 0, 0)))
    args.append(x)

    return pl.pallas_call(
        kernel,
        out_shape=jax.ShapeDtypeStruct((N, Co, out_hw), x.dtype),
        grid=(N,),
        in_specs=in_specs,
        out_specs=pl.BlockSpec((1, Co, out_hw), lambda n: (n, 0, 0)),
        scratch_shapes=[pltpu.VMEM((Ci, HW + 2 * pad), jnp.float32)],
        compiler_params=pltpu.CompilerParams(dimension_semantics=("parallel",)),
    )(*args)


def _dense_head_kernel(x_ref, w0_ref, b0_ref, w1_ref, b1_ref, o_ref):
    # dense0 + lrelu + dense1 + lrelu for the whole batch in one shot.
    h = jnp.dot(x_ref[...], w0_ref[...], preferred_element_type=jnp.float32)
    h = _lrelu(h + b0_ref[...])
    y = jnp.sum(h * w1_ref[...], axis=1, keepdims=True) + b1_ref[...]
    o_ref[...] = _lrelu(y).astype(o_ref.dtype)


def dense_head(xf, w0t, b0, w1, b1):
    """xf: (N, F); w0t: (F, D0); b0: (1, D0); w1: (1, D0); b1: (1, 1) -> (N, 1)."""
    N, F = xf.shape
    D0 = w0t.shape[1]
    return pl.pallas_call(
        _dense_head_kernel,
        out_shape=jax.ShapeDtypeStruct((N, 1), xf.dtype),
        grid=(1,),
        in_specs=[
            pl.BlockSpec((N, F), lambda i: (0, 0)),
            pl.BlockSpec((F, D0), lambda i: (0, 0)),
            pl.BlockSpec((1, D0), lambda i: (0, 0)),
            pl.BlockSpec((1, D0), lambda i: (0, 0)),
            pl.BlockSpec((1, 1), lambda i: (0, 0)),
        ],
        out_specs=pl.BlockSpec((N, 1), lambda i: (0, 0)),
        compiler_params=pltpu.CompilerParams(dimension_semantics=("arbitrary",)),
    )(xf, w0t, b0, w1, b1)


# ----------------------------------------------------------------------------
# model configuration, parameters, forward, reference
# ----------------------------------------------------------------------------

def discriminator_config(resolution, fmap_base, fmap_max, fmap_decay=1.0):
    res_log2 = int(np.log2(resolution))
    assert resolution == 2 ** res_log2 and resolution >= 4
    nf = lambda stage: min(int(fmap_base / (2.0 ** (stage * fmap_decay))), fmap_max)
    blocks = [(nf(res_log2 - 1), nf(res_log2 - 1))]            # block0 (avg_pool)
    for i in range(1, res_log2 - 2):
        # TODO(synk): DownBlock(type='conv') stride-2 downsampling (used for i >= 4,
        # i.e. resolution >= 128) is not implemented; small resolutions only hit the
        # avg_pool path, matching the module exactly here.
        assert i < 4, "conv-type downsampling not implemented"
        blocks.append((nf(res_log2 - i), nf(res_log2 - i - 1)))
    assert nf(1) * 4 * 4 == fmap_base, "flatten size must match dense0 in_features"
    return res_log2, nf, blocks


def init_discriminator_params(key, resolution, fmap_base, fmap_max, num_channels):
    res_log2, nf, blocks = discriminator_config(resolution, fmap_base, fmap_max)
    keys = iter(jax.random.split(key, 2 + 2 * len(blocks) + 6))

    def conv_w(k, co, ci, ks):
        return jax.random.normal(k, (co, ci, ks, ks), jnp.float32) / np.sqrt(ci * ks * ks)

    def dense_w(k, co, ci):
        return jax.random.normal(k, (co, ci), jnp.float32) / np.sqrt(ci)

    def bias(k, c):
        return 0.1 * jax.random.normal(k, (c,), jnp.float32)

    p = {}
    c0 = nf(res_log2 - 1)
    p['fromrgb_w'] = conv_w(next(keys), c0, num_channels, 1)
    p['fromrgb_b'] = bias(next(keys), c0)
    p['blocks'] = [(conv_w(next(keys), co, ci, 3), bias(next(keys), co))
                   for ci, co in blocks]
    p['final_w'] = conv_w(next(keys), nf(1), nf(2), 3)
    p['final_b'] = bias(next(keys), nf(1))
    p['dense0_w'] = dense_w(next(keys), nf(0), fmap_base)
    p['dense0_b'] = bias(next(keys), nf(0))
    p['dense1_w'] = dense_w(next(keys), 1, nf(0))
    p['dense1_b'] = bias(next(keys), 1)
    return p


def prepare_kernel_params(params, resolution):
    """One-time repack of parameters into kernel-friendly layouts + constants."""
    kp = {}
    kp['fromrgb_w'] = params['fromrgb_w'][:, :, 0, 0]             # (C0, Cin)
    kp['fromrgb_b'] = params['fromrgb_b'].reshape(-1, 1)
    kp['down_blocks'] = []
    h = resolution
    for w, b in params['blocks']:
        co, ci = w.shape[0], w.shape[1]
        w9 = jnp.transpose(w, (2, 3, 0, 1)).reshape(9, co, ci)    # tap-major weights
        kp['down_blocks'].append(
            (w9, b.reshape(-1, 1),
             jnp.asarray(make_shift_masks(h, h)),
             jnp.asarray(make_pool_matrix(h, h))))
        h //= 2
    wf = params['final_w']
    co, ci = wf.shape[0], wf.shape[1]
    kp['final_w9'] = jnp.transpose(wf, (2, 3, 0, 1)).reshape(9, co, ci)
    kp['final_b'] = params['final_b'].reshape(-1, 1)
    kp['final_masks'] = jnp.asarray(make_shift_masks(h, h))
    kp['dense0_wt'] = params['dense0_w'].T                        # (F, D0)
    kp['dense0_b'] = params['dense0_b'].reshape(1, -1)
    kp['dense1_w'] = params['dense1_w']                           # (1, D0)
    kp['dense1_b'] = params['dense1_b'].reshape(1, -1)
    return kp


def style_discriminator_forward(x, kp):
    """x: (N, Cin, H, W) float32 -> (N, 1).  All math runs inside Pallas kernels;
    the wrapper only does free contiguous reshapes (no transposes)."""
    N, Cin, H, W = x.shape
    y = conv1x1_lrelu(x.reshape(N, Cin, H * W), kp['fromrgb_w'], kp['fromrgb_b'])
    h = H
    for w9, b, masks, pmat in kp['down_blocks']:
        y = conv3x3_block(y, w9, b, masks, h, h, pool_mat=pmat)
        h //= 2
    y = conv3x3_block(y, kp['final_w9'], kp['final_b'], kp['final_masks'], h, h)
    yf = y.reshape(N, -1)                 # matches torch .view(N, -1) ordering
    return dense_head(yf, kp['dense0_wt'], kp['dense0_b'], kp['dense1_w'], kp['dense1_b'])


def style_discriminator_ref(x, params):
    """Pure-JAX/XLA reference mirroring the PyTorch forward exactly (f=None)."""
    hp = jax.lax.Precision.HIGHEST
    dn = ('NCHW', 'OIHW', 'NCHW')
    y = jax.lax.conv_general_dilated(x, params['fromrgb_w'], (1, 1), 'VALID',
                                     dimension_numbers=dn, precision=hp)
    y = _lrelu(y + params['fromrgb_b'][None, :, None, None])
    for w, b in params['blocks']:
        y = jax.lax.conv_general_dilated(y, w, (1, 1), ((1, 1), (1, 1)),
                                         dimension_numbers=dn, precision=hp)
        y = _lrelu(y + b[None, :, None, None])
        # Blur2d(f=None) is the identity.
        n, c, hh, ww = y.shape
        y = y.reshape(n, c, hh // 2, 2, ww // 2, 2).mean(axis=(3, 5))   # AvgPool2d(2)
        y = _lrelu(y)
    y = jax.lax.conv_general_dilated(y, params['final_w'], (1, 1), ((1, 1), (1, 1)),
                                     dimension_numbers=dn, precision=hp)
    y = _lrelu(y + params['final_b'][None, :, None, None])
    y = y.reshape(y.shape[0], -1)
    y = _lrelu(jnp.dot(y, params['dense0_w'].T, precision=hp) + params['dense0_b'])
    y = _lrelu(jnp.dot(y, params['dense1_w'].T, precision=hp) + params['dense1_b'])
    return y


if __name__ == "__main__":
    # Small config consistent with the module's constraints: resolution >= 4, power of 2,
    # and fmap_max = fmap_base / 16 so the flattened final feature map (nf(1)*4*4)
    # matches dense0's in_features (same relation the default 8192/512 config satisfies).
    resolution = 16
    fmap_base, fmap_max, num_channels = 512, 32, 3
    N = 2

    key = jax.random.PRNGKey(0)
    pkey, xkey = jax.random.split(key)
    params = init_discriminator_params(pkey, resolution, fmap_base, fmap_max, num_channels)
    x = jax.random.normal(xkey, (N, num_channels, resolution, resolution), jnp.float32)

    kparams = prepare_kernel_params(params, resolution)
    out = jax.block_until_ready(style_discriminator_forward(x, kparams))
    ref = jax.block_until_ready(style_discriminator_ref(x, params))

    assert out.shape == (N, 1), out.shape
    # Tolerance covers MXU multi-pass f32 rounding differences vs the XLA reference.
    max_err = float(jnp.max(jnp.abs(out - ref)))
    assert jnp.allclose(out, ref, atol=1e-2, rtol=1e-2), (
        f"mismatch vs reference (max abs err {max_err}): {out} vs {ref}")
    print("KERNEL_OK")
</pallas_src>

<mosaic_0001>
module attributes {stable_mosaic.version = 11 : i64} {
  func.func @_conv1x1_lrelu_kernel(%arg0: i32, %arg1: memref<32x3xf32, #tpu.memory_space<vmem>>, %arg2: memref<32x1xf32, #tpu.memory_space<vmem>>, %arg3: memref<1x3x256xf32, #tpu.memory_space<vmem>>, %arg4: memref<1x32x256xf32, #tpu.memory_space<vmem>>) attributes {dimension_semantics = [#tpu.dimension_semantics<parallel>], iteration_bounds = array<i64: 2>, scalar_prefetch = 0 : i64, scratch_operands = 0 : i64, tpu.core_type = #tpu.core_type<tc>, window_params = [{pipeline_mode = #tpu.pipeline_mode<synchronous>, transform_indices = @transform_0, window_bounds = array<i64: 32, 3>}, {pipeline_mode = #tpu.pipeline_mode<synchronous>, transform_indices = @transform_1, window_bounds = array<i64: 32, 1>}, {transform_indices = @transform_2, window_bounds = array<i64: 1, 3, 256>}, {transform_indices = @transform_3, window_bounds = array<i64: 1, 32, 256>}]} {
    %c0 = arith.constant 0 : index
    %c0_0 = arith.constant 0 : index
    %0 = vector.load %arg1[%c0, %c0_0] : memref<32x3xf32, #tpu.memory_space<vmem>>, vector<32x3xf32>
    %c0_1 = arith.constant 0 : index
    %c0_2 = arith.constant 0 : index
    %c0_3 = arith.constant 0 : index
    %1 = vector.load %arg3[%c0_1, %c0_2, %c0_3] : memref<1x3x256xf32, #tpu.memory_space<vmem>>, vector<1x3x256xf32>
    %2 = vector.shape_cast %1 : vector<1x3x256xf32> to vector<3x256xf32>
    %cst = arith.constant dense<0.000000e+00> : vector<32x256xf32>
    %3 = tpu.matmul %0, %2, %cst {dimension_numbers = #tpu.dot_dimension_numbers<[1], [0], [0], [1], [0, 0, 1, 1], [], []>} : vector<32x3xf32>, vector<3x256xf32>, vector<32x256xf32> -> vector<32x256xf32>
    %c0_4 = arith.constant 0 : index
    %c0_5 = arith.constant 0 : index
    %4 = vector.load %arg2[%c0_4, %c0_5] : memref<32x1xf32, #tpu.memory_space<vmem>>, vector<32x1xf32>
    %5 = vector.broadcast %4 : vector<32x1xf32> to vector<32x256xf32>
    %6 = arith.addf %3, %5 : vector<32x256xf32>
    %cst_6 = arith.constant 0.000000e+00 : f32
    %7 = vector.broadcast %cst_6 : f32 to vector<32x256xf32>
    %8 = arith.cmpf oge, %6, %7 : vector<32x256xf32>
    %cst_7 = arith.constant 2.000000e-01 : f32
    %9 = vector.broadcast %cst_7 : f32 to vector<32x256xf32>
    %10 = arith.mulf %9, %6 : vector<32x256xf32>
    %11 = arith.select %8, %6, %10 : vector<32x256xi1>, vector<32x256xf32>
    %c0_8 = arith.constant 0 : index
    %c0_9 = arith.constant 0 : index
    %c0_10 = arith.constant 0 : index
    %12 = vector.load %arg4[%c0_8, %c0_9, %c0_10] : memref<1x32x256xf32, #tpu.memory_space<vmem>>, vector<1x32x256xf32>
    %13 = vector.shape_cast %12 : vector<1x32x256xf32> to vector<32x256xf32>
    %14 = vector.shape_cast %11 : vector<32x256xf32> to vector<1x32x256xf32>
    tpu.vector_store %arg4[%c0_8, %c0_9, %c0_10], %14 {strides = array<i32>} : memref<1x32x256xf32, #tpu.memory_space<vmem>>, vector<1x32x256xf32>,
    return
  }
  func.func @transform_0(%arg0: i32) -> (i32, i32) {
    %c0_i32 = arith.constant 0 : i32
    %c0_i32_0 = arith.constant 0 : i32
    %c0_i32_1 = arith.constant 0 : i32
    return %c0_i32, %c0_i32_0 : i32, i32
  }
  func.func @transform_1(%arg0: i32) -> (i32, i32) {
    %c0_i32 = arith.constant 0 : i32
    %c0_i32_0 = arith.constant 0 : i32
    %c0_i32_1 = arith.constant 0 : i32
    return %c0_i32, %c0_i32_0 : i32, i32
  }
  func.func @transform_2(%arg0: i32) -> (i32, i32, i32) {
    %c0_i32 = arith.constant 0 : i32
    %c0_i32_0 = arith.constant 0 : i32
    %c0_i32_1 = arith.constant 0 : i32
    return %arg0, %c0_i32, %c0_i32_0 : i32, i32, i32
  }
  func.func @transform_3(%arg0: i32) -> (i32, i32, i32) {
    %c0_i32 = arith.constant 0 : i32
    %c0_i32_0 = arith.constant 0 : i32
    %c0_i32_1 = arith.constant 0 : i32
    return %arg0, %c0_i32, %c0_i32_0 : i32, i32, i32
  }
}

</mosaic_0001>

<llo_original>
// kernel: tpu_custom_call.1
$region0: #{tpu_custom_call.1}
  #allocation0 [shape = 'u32[]', space=smem, size = 0x4, offset = 0x4, fixed_abs, tag = 'smem constant byte address 0x4 - core index']
  #allocation1 [shape = 'u32[144,128]{1,0:T(1,128)}', space=vmem, size = 0x12000, scoped, tag = 'internal scratch']
  %s0 = inlined_call_operand.vmem [shape: f32[32,3], index: 0, kind: input, shape index: {}]
  %s1 = inlined_call_operand.vmem [shape: f32[32,1], index: 1, kind: input, shape index: {}]
  %s2 = inlined_call_operand.vmem [shape: f32[2,3,256], index: 2, kind: input, shape index: {}]
  %s3 = inlined_call_operand.hbm [shape: f32[2,32,256], index: 3, kind: output, shape index: {}]
  %s4 = sld [smem:[#allocation0]]
  $region45: #{tpu_custom_call.1} parent=0
    _
  %s6 = ssub.s32 1, %s4
  %s7 = scalar_select 0, %s6, %s4
  $region1: #{tpu_custom_call.1} parent=0
    #allocation2 [shape = 'u8[65536]{0}', space=vmem, size = 0x10000, scoped, tag = 'output window, operand 0']
    #allocation3 [shape = 's32[2]{0}', space=sflag, size = 0x8, scoped, tag = 'scoped memory for tpu_custom_call.1']
    %8 = vsyncpa [#allocation3], 0
    %s9 = scalar_lea.sflag [#allocation3], 1
    %10 = vsyncpa %s9, 0
    loop: start=0, step=1, limit=4
    $region2: #{tpu_custom_call.1} parent=1 // loop_pre_header
      _
    $region3: #{tpu_custom_call.1} parent=1 // loop_header
      %s12 = sphi 0, %s16
      %p13 = scmp.ge.s32.totalorder %s12, 4
      %s20 = sphi 0, %s20
      %s22 = sphi 0, %s20
      %s23 = sphi 0, %s22
      %s37 = sphi 0, %s23
      %s41 = sphi 0, %s41
      %s43 = sphi 0, %s41
      %s44 = sphi 0, %s43
      %s58 = sphi 0, %s44
      %s64 = sphi 0, %s66
      %s67 = sphi 0, %s64
      %s68 = sphi 0, %s67
      %s84 = sphi 0, %s68
      %s90 = sphi 0, %s92
      %s93 = sphi 0, %s90
      %s94 = sphi 0, %s93
      %s110 = sphi 0, %s94
    $region4: #{tpu_custom_call.1} parent=1 // loop_header_branch
      %15 = sbr.rel (%p13) target = $region8
    $region5: #{tpu_custom_call.1} parent=1 // loop_body
      %s17 = ssub.s32 %s12, 1
      %s18 = ssub.s32 %s12, 2
      %s19 = sadd.s32 %s12, 1
      %s21 = sadd.s32 %s20, 1
      %p24 = scmp.eq.s32.totalorder %s12, 1
      %p25 = scmp.ne.s32.totalorder %s20, %s22
      %p26 = scmp.eq.s32.totalorder %s12, 0
      %p27 = por %p25, %p26
      %p28 = scmp.ne.s32.totalorder %s20, %s22
      %p29 = scmp.eq.s32.totalorder %s17, 1
      %p30 = por %p28, %p29
      %p31 = scmp.ne.s32.totalorder %s22, %s23
      %p32 = scmp.eq.s32.totalorder %s17, 0
      %p33 = por %p31, %p32
      %p34 = scmp.ne.s32.totalorder %s22, %s23
      %p35 = scmp.eq.s32.totalorder %s18, 1
      %p36 = por %p34, %p35
      %p38 = scmp.ne.s32.totalorder %s23, %s37
      %p39 = scmp.eq.s32.totalorder %s18, 0
      %p40 = por %p38, %p39
      %s42 = sadd.s32 %s41, 1
      %p45 = scmp.eq.s32.totalorder %s12, 1
      %p46 = scmp.ne.s32.totalorder %s41, %s43
      %p47 = scmp.eq.s32.totalorder %s12, 0
      %p48 = por %p46, %p47
      %p49 = scmp.ne.s32.totalorder %s41, %s43
      %p50 = scmp.eq.s32.totalorder %s17, 1
      %p51 = por %p49, %p50
      %p52 = scmp.ne.s32.totalorder %s43, %s44
      %p53 = scmp.eq.s32.totalorder %s17, 0
      %p54 = por %p52, %p53
      %p55 = scmp.ne.s32.totalorder %s43, %s44
      %p56 = scmp.eq.s32.totalorder %s18, 1
      %p57 = por %p55, %p56
      %p59 = scmp.ne.s32.totalorder %s44, %s58
      %p60 = scmp.eq.s32.totalorder %s18, 0
      %p61 = por %p59, %p60
      %s62 = ssub.s32 %s12, %s19
      %p63 = scmp.eq.s32.totalorder %s62, 0
      %s65 = sadd.s32 %s64, 1
      %s66 = scalar_select %p63, %s64, %s65
      %p69 = pneg %p63
      %p70 = scmp.eq.s32.totalorder %s12, 1
      %p71 = por %p69, %p70
      %p72 = scmp.ne.s32.totalorder %s64, %s67
      %p73 = scmp.eq.s32.totalorder %s12, 0
      %p74 = por %p72, %p73
      %p75 = scmp.ne.s32.totalorder %s64, %s67
      %p76 = scmp.eq.s32.totalorder %s17, 1
      %p77 = por %p75, %p76
      %p78 = scmp.ne.s32.totalorder %s67, %s68
      %p79 = scmp.eq.s32.totalorder %s17, 0
      %p80 = por %p78, %p79
      %p81 = scmp.ne.s32.totalorder %s67, %s68
      %p82 = scmp.eq.s32.totalorder %s18, 1
      %p83 = por %p81, %p82
      %p85 = scmp.ne.s32.totalorder %s68, %s84
      %p86 = scmp.eq.s32.totalorder %s18, 0
      %p87 = por %p85, %p86
      %s88 = ssub.s32 %s12, %s19
      %p89 = scmp.eq.s32.totalorder %s88, 0
      %s91 = sadd.s32 %s90, 1
      %s92 = scalar_select %p89, %s90, %s91
      %p95 = pneg %p89
      %p96 = scmp.eq.s32.totalorder %s12, 1
      %p97 = por %p95, %p96
      %p98 = scmp.ne.s32.totalorder %s90, %s93
      %p99 = scmp.eq.s32.totalorder %s12, 0
      %p100 = por %p98, %p99
      %p101 = scmp.ne.s32.totalorder %s90, %s93
      %p102 = scmp.eq.s32.totalorder %s17, 1
      %p103 = por %p101, %p102
      %p104 = scmp.ne.s32.totalorder %s93, %s94
      %p105 = scmp.eq.s32.totalorder %s17, 0
      %p106 = por %p104, %p105
      %p107 = scmp.ne.s32.totalorder %s93, %s94
      %p108 = scmp.eq.s32.totalorder %s18, 1
      %p109 = por %p107, %p108
      %p111 = scmp.ne.s32.totalorder %s94, %s110
      %p112 = scmp.eq.s32.totalorder %s18, 0
      %p113 = por %p111, %p112
      %p114 = scmp.le.s32.totalorder 1, %s12
      %p115 = scmp.lt.s32.totalorder %s12, 3
      %p116 = pnand %p114, %p115
      %p117 = pneg %p116
      // Predicated region
      $region9: #{tpu_custom_call.1} parent=5 // pred_check
        _
      $region10: #{tpu_custom_call.1} parent=5 // pred_check_branch
        %119 = sbr.rel (%p116) target = $region12
      $region11: #{tpu_custom_call.1} parent=5 // pred_region
        %s120 = ssub.s32 %s12, 1
        // Predicated region
        $region13: #{tpu_custom_call.1} parent=11 // pred_check
          %p121 = pneg %p33
        $region14: #{tpu_custom_call.1} parent=11 // pred_check_branch
          %123 = sbr.rel (%p121) target = $region16
        $region15: #{tpu_custom_call.1} parent=11 // pred_region
          _
        $region16: #{tpu_custom_call.1} parent=11 // pred_fallthru
          _
        // Predicated region
        $region17: #{tpu_custom_call.1} parent=11 // pred_check
          %p124 = pneg %p54
        $region18: #{tpu_custom_call.1} parent=11 // pred_check_branch
          %126 = sbr.rel (%p124) target = $region20
        $region19: #{tpu_custom_call.1} parent=11 // pred_region
          _
        $region20: #{tpu_custom_call.1} parent=11 // pred_fallthru
          _
      $region12: #{tpu_custom_call.1} parent=5 // pred_fallthru
        _
      %p127 = scmp.lt.s32.totalorder %s12, 2
      // Predicated region
      $region21: #{tpu_custom_call.1} parent=5 // pred_check
        %p128 = pneg %p127
      $region22: #{tpu_custom_call.1} parent=5 // pred_check_branch
        %130 = sbr.rel (%p128) target = $region24
      $region23: #{tpu_custom_call.1} parent=5 // pred_region
        // Predicated region
        $region25: #{tpu_custom_call.1} parent=23 // pred_check
          %p131 = pneg %p74
        $region26: #{tpu_custom_call.1} parent=23 // pred_check_branch
          %133 = sbr.rel (%p131) target = $region28
        $region27: #{tpu_custom_call.1} parent=23 // pred_region
          %p134 = scmp.lt.s32.totalorder %s12, 1
          %s135 = scalar_select %p134, %s12, 1
          %s136 = smul.addr %s135, 2
          %s137 = smul.addr %s136, 4
          %s138 = scalar_lea.vmem %s2, %s137
        $region28: #{tpu_custom_call.1} parent=23 // pred_fallthru
          _
      $region24: #{tpu_custom_call.1} parent=5 // pred_fallthru
        _
      %p139 = scmp.le.s32.totalorder 1, %s12
      %p140 = scmp.lt.s32.totalorder %s12, 3
      %p141 = pnand %p139, %p140
      %p142 = pneg %p141
      // Predicated region
      $region29: #{tpu_custom_call.1} parent=5 // pred_check
        _
      $region30: #{tpu_custom_call.1} parent=5 // pred_check_branch
        %144 = sbr.rel (%p141) target = $region32
      $region31: #{tpu_custom_call.1} parent=5 // pred_region
        %s145 = ssub.s32 %s12, 1
        %p146 = pneg %p33
        %p147 = pneg %p30
        %p148 = pneg %p54
        %p149 = pneg %p51
        %p150 = scmp.lt.s32.totalorder %s17, 1
        %s151 = scalar_select %p150, %s17, 1
        %s152 = smul.addr %s151, 2
        %s153 = smul.addr %s152, 4
        %s154 = scalar_lea.vmem %s2, %s153
        %p155 = pneg %p80
        %p156 = pneg %p77
        %p157 = pneg %p106
        %p158 = pneg %p103
        %s159 = sand.u32 %s93, 1
        %s160 = scalar_lea.sflag [#allocation3], %s159
        %s161 = sand.u32 %s93, 1
        %s162 = smul.addr %s161, 64
        %s163 = scalar_lea.vmem [#allocation2], %s162
        %p164 = scmp.lt.s32.totalorder %s17, 1
        %s165 = scalar_select %p164, %s17, 1
        %s166 = smul.addr %s165, 2
        %s167 = smul.addr %s166, 4
        %s168 = scalar_lea.vmem %s2, %s167
        %v169 = vld [vmem:[%s0] sm:$0xff]
        %v170 = vld [vmem:[%s0 + $0x8] sm:$0xff]
        %v171 = vld [vmem:[%s0 + $0x10] sm:$0xff]
        %v172 = vld [vmem:[%s0 + $0x18] sm:$0xff]
        %v173 = vld [vmem:[%s168] sm:$0x77]
        %v174 = vld [vmem:[%s1] sm:$0xff]
        %v175 = vld [vmem:[%s1 + $0x8] sm:$0xff]
        %v176 = vld [vmem:[%s1 + $0x10] sm:$0xff]
        %v177 = vld [vmem:[%s1 + $0x18] sm:$0xff]
        %179 = vset.pattern.permute.xlu0 0
        %180 = vperm.xlu0 %179, %v174
        %v181 = vpop.permute.xlu0 %180
        %184 = vset.pattern.permute.xlu0 0
        %185 = vperm.xlu0 %184, %v175
        %v186 = vpop.permute.xlu0 %185
        %189 = vset.pattern.permute.xlu0 0
        %190 = vperm.xlu0 %189, %v176
        %v191 = vpop.permute.xlu0 %190
        %194 = vset.pattern.permute.xlu0 0
        %195 = vperm.xlu0 %194, %v177
        %v196 = vpop.permute.xlu0 %195
        %v199 = vcombine.high %v173, %v173
        %vm200 = vcmask 23552
        %v202 = vsel %vm200, %v169, 0
        %v205 = vsel %vm200, %v170, 0
        %v208 = vsel %vm200, %v171, 0
        %v211 = vsel %vm200, %v172, 0
        %vm213 = vcmask 1042432
        %v214 = vsel %vm213, %v173, 0
        %v216 = vsel %vm213, %v199, 0
        %218 = vmatprep.subr.mxu0 %v216
        %219 = vmatpush1.msra.mxu0 %v214
        %220 = vmatprep.subr.mxu0 0.0
        %221 = vmatpush1.msra.mxu0 0.0
        %222 = vmatprep.subr.mxu0 0.0
        %223 = vmatpush1.msra.mxu0 0.0
        %224 = vmatprep.subr.mxu0 0.0
        %225 = vmatpush1.msra.mxu0 0.0
        %226 = vmatprep.subr.mxu0 0.0
        %227 = vmatpush1.msra.mxu0 0.0
        %228 = vmatprep.subr.mxu0 0.0
        %229 = vmatpush1.msra.mxu0 0.0
        %230 = vmatprep.subr.mxu0 0.0
        %231 = vmatpush1.msra.mxu0 0.0
        %232 = vmatprep.subr.mxu0 0.0
        %233 = vmatpush1.msra.mxu0 0.0
        %234 = vmatprep.subr.mxu0 0.0
        %235 = vmatpush1.msra.mxu0 0.0
        %236 = vmatprep.subr.mxu0 0.0
        %237 = vmatpush1.msra.mxu0 0.0
        %238 = vmatprep.subr.mxu0 0.0
        %239 = vmatpush1.msra.mxu0 0.0
        %240 = vmatprep.subr.mxu0 0.0
        %241 = vmatpush1.msra.mxu0 0.0
        %242 = vmatprep.subr.mxu0 0.0
        %243 = vmatpush1.msra.mxu0 0.0
        %244 = vmatprep.subr.mxu0 0.0
        %245 = vmatpush1.msra.mxu0 0.0
        %246 = vmatprep.subr.mxu0 0.0
        %247 = vmatpush1.msra.mxu0 0.0
        %248 = vmatprep.subr.mxu0 0.0
        %249 = vmatpush1.msra.mxu0 0.0
        %250 = vmatprep.subr.mxu0 0.0
        %251 = vmatpush1.msra.mxu0 0.0
        %252 = vmatprep.subr.mxu0 0.0
        %253 = vmatpush1.msra.mxu0 0.0
        %254 = vmatprep.subr.mxu0 0.0
        %255 = vmatpush1.msra.mxu0 0.0
        %256 = vmatprep.subr.mxu0 0.0
        %257 = vmatpush1.msra.mxu0 0.0
        %258 = vmatprep.subr.mxu0 0.0
        %259 = vmatpush1.msra.mxu0 0.0
        %260 = vmatprep.subr.mxu0 0.0
        %261 = vmatpush1.msra.mxu0 0.0
        %262 = vmatprep.subr.mxu0 0.0
        %263 = vmatpush1.msra.mxu0 0.0
        %264 = vmatprep.subr.mxu0 0.0
        %265 = vmatpush1.msra.mxu0 0.0
        %266 = vmatprep.subr.mxu0 0.0
        %267 = vmatpush1.msra.mxu0 0.0
        %268 = vmatprep.subr.mxu0 0.0
        %269 = vmatpush1.msra.mxu0 0.0
        %270 = vmatprep.subr.mxu0 0.0
        %271 = vmatpush1.msra.mxu0 0.0
        %272 = vmatprep.subr.mxu0 0.0
        %273 = vmatpush1.msra.mxu0 0.0
        %274 = vmatprep.subr.mxu0 0.0
        %275 = vmatpush1.msra.mxu0 0.0
        %276 = vmatprep.subr.mxu0 0.0
        %277 = vmatpush1.msra.mxu0 0.0
        %278 = vmatprep.subr.mxu0 0.0
        %279 = vmatpush1.msra.mxu0 0.0
        %280 = vmatprep.subr.mxu0 0.0
        %281 = vmatpush1.msra.mxu0 0.0
        %282 = vmatprep.mubr.f32.mxu0 0.0
        %283 = vmatmul.mubr.f32.gmra.mrb[0].mxu0 %v202
        %v284 = vpop.f32.mrb[0].mxu0
        %v285 = vadd.f32 %v181, %v284
        %v286 = vpop.f32.mrb[0].mxu0
        %v287 = vadd.f32 %v181, %v286
        %288 = vmatprep.mubr.f32.mxu0 0.0
        %289 = vmatmul.mubr.f32.gmra.mrb[0].mxu0 %v205
        %v290 = vpop.f32.mrb[0].mxu0
        %v291 = vadd.f32 %v186, %v290
        %v292 = vpop.f32.mrb[0].mxu0
        %v293 = vadd.f32 %v186, %v292
        %294 = vmatprep.mubr.f32.mxu0 0.0
        %295 = vmatmul.mubr.f32.gmra.mrb[0].mxu0 %v208
        %v296 = vpop.f32.mrb[0].mxu0
        %v297 = vadd.f32 %v191, %v296
        %v298 = vpop.f32.mrb[0].mxu0
        %v299 = vadd.f32 %v191, %v298
        %300 = vmatprep.mubr.f32.mxu0 0.0
        %301 = vmatmul.mubr.f32.gmra.mrb[0].mxu0 %v211
        %v302 = vpop.f32.mrb[0].mxu0
        %v303 = vadd.f32 %v196, %v302
        %v304 = vpop.f32.mrb[0].mxu0
        %v305 = vadd.f32 %v196, %v304
        %306 = vdwg.mxu0
        %vm307 = vcmp.ge.f32.partialorder %v285, 0.0
        %vm308 = vcmp.ge.f32.partialorder %v287, 0.0
        %vm309 = vcmp.ge.f32.partialorder %v291, 0.0
        %vm310 = vcmp.ge.f32.partialorder %v293, 0.0
        %vm311 = vcmp.ge.f32.partialorder %v297, 0.0
        %vm312 = vcmp.ge.f32.partialorder %v299, 0.0
        %vm313 = vcmp.ge.f32.partialorder %v303, 0.0
        %vm314 = vcmp.ge.f32.partialorder %v305, 0.0
        %v315 = vmul.f32 %v285, 0.2
        %v316 = vmul.f32 %v287, 0.2
        %v317 = vmul.f32 %v291, 0.2
        %v318 = vmul.f32 %v293, 0.2
        %v319 = vmul.f32 %v297, 0.2
        %v320 = vmul.f32 %v299, 0.2
        %v321 = vmul.f32 %v303, 0.2
        %v322 = vmul.f32 %v305, 0.2
        %v323 = vsel %vm307, %v285, %v315
        %v324 = vsel %vm308, %v287, %v316
        %v325 = vsel %vm309, %v291, %v317
        %v326 = vsel %vm310, %v293, %v318
        %v327 = vsel %vm311, %v297, %v319
        %v328 = vsel %vm312, %v299, %v320
        %v329 = vsel %vm313, %v303, %v321
        %v330 = vsel %vm314, %v305, %v322
        %331 = vst [vmem:[%s163] sm:$0xff] %v323
        %332 = vst [vmem:[%s163 + $0x8] sm:$0xff] %v324
        %333 = vst [vmem:[%s163 + $0x10] sm:$0xff] %v325
        %334 = vst [vmem:[%s163 + $0x18] sm:$0xff] %v326
        %335 = vst [vmem:[%s163 + $0x20] sm:$0xff] %v327
        %336 = vst [vmem:[%s163 + $0x28] sm:$0xff] %v328
        %337 = vst [vmem:[%s163 + $0x30] sm:$0xff] %v329
        %338 = vst [vmem:[%s163 + $0x38] sm:$0xff] %v330
        %s339 = sand.u32 %s93, 1
        %s340 = scalar_lea.sflag [#allocation3], %s339
        %s341 = sand.u32 %s93, 1
        %s342 = smul.addr %s341, 64
        %s343 = scalar_lea.vmem [#allocation2], %s342
        // Predicated region
        $region33: #{tpu_custom_call.1} parent=31 // pred_check
          %p344 = pneg %p103
        $region34: #{tpu_custom_call.1} parent=31 // pred_check_branch
          %346 = sbr.rel (%p344) target = $region36
        $region35: #{tpu_custom_call.1} parent=31 // pred_region
          %s348 = ssub.s32 1024, 1024
          %349 = vsyncadd %s340, %s348
          %s350 = smul.addr %s17, 8
          %s351 = smul.addr %s350, 128
          %s352 = scalar_lea.hbm %s3, %s351
          %s353 = sshll.u32 %s343, 4
          %s354 = int_to_ptr.vmem [resolvable:$true] %s353
          %359 = dma.vmem_to_hbm [thread:$0]  %s354, 1024, %s352, %s340, 256, 256, 16
        $region36: #{tpu_custom_call.1} parent=31 // pred_fallthru
          _
      $region32: #{tpu_custom_call.1} parent=5 // pred_fallthru
        _
      %p360 = scmp.le.s32.totalorder 2, %s12
      // Predicated region
      $region37: #{tpu_custom_call.1} parent=5 // pred_check
        %p361 = pneg %p360
      $region38: #{tpu_custom_call.1} parent=5 // pred_check_branch
        %363 = sbr.rel (%p361) target = $region40
      $region39: #{tpu_custom_call.1} parent=5 // pred_region
        %s364 = ssub.s32 %s12, 2
        // Predicated region
        $region41: #{tpu_custom_call.1} parent=39 // pred_check
          %p365 = pneg %p109
        $region42: #{tpu_custom_call.1} parent=39 // pred_check_branch
          %367 = sbr.rel (%p365) target = $region44
        $region43: #{tpu_custom_call.1} parent=39 // pred_region
          %s368 = sand.u32 %s94, 1
          %s369 = scalar_lea.sflag [#allocation3], %s368
          %s370 = sand.u32 %s94, 1
          %s371 = smul.addr %s370, 64
          %s372 = scalar_lea.vmem [#allocation2], %s371
          %373 = dma.done %s369, 1024
        $region44: #{tpu_custom_call.1} parent=39 // pred_fallthru
          _
      $region40: #{tpu_custom_call.1} parent=5 // pred_fallthru
        _
    $region6: #{tpu_custom_call.1} parent=1 // loop_footer
      %s16 = sadd.s32 1, %s12
    $region7: #{tpu_custom_call.1} parent=1 // loop_footer_branch
      %11 = sbr.rel target = $region3
    $region8: #{tpu_custom_call.1} parent=1 // loop_exit
      _
    %374 = vsyncpa [#allocation3], 1
    %s375 = scalar_lea.sflag [#allocation3], 1
    %376 = vsyncpa %s375, 1

</llo_original>
